<compile_context>
chip_gen: v7x
topology: tpu7x:2x2x1
jax: 0.10.0
libtpu: 0.0.40
codegen_flags: <defaults>
</compile_context>

<pallas_src>
import math
import functools

import jax
import jax.numpy as jnp
from jax import lax
from jax.experimental import pallas as pl
from jax.experimental.pallas import tpu as pltpu


def _round_up(x, m):
    return ((x + m - 1) // m) * m


def _default_c_tile():
    # v6e/v7x MXU is 256x256 -> 256-row C tiles fill it; v5e (128x128) -> 128.
    try:
        kind = jax.devices()[0].device_kind.lower()
    except Exception:
        return 128
    if "v6" in kind or "v7" in kind:
        return 256
    return 128


def _attention_kernel(w_ref, keys_ref, out_ref, m_sc, l_sc, acc_sc, *,
                      inv_sqrt_d, l_actual, tk, need_l_mask, compute_dtype):
    # w_ref:    (tc, Dp)     f32 tile of U.weight rows (label queries)
    # keys_ref: (1, tk, Dp)  compute_dtype tile of one batch element's keys
    # out_ref:  (1, tc, Dp)  per-label attention vectors for this tile
    # m_sc/l_sc:(tc, 1) f32  running max / running denom (online softmax)
    # acc_sc:   (tc, Dp) f32 running unnormalized output accumulator
    k = pl.program_id(2)

    @pl.when(k == 0)
    def _init():
        m_sc[...] = jnp.full_like(m_sc, -jnp.inf)
        l_sc[...] = jnp.zeros_like(l_sc)
        acc_sc[...] = jnp.zeros_like(acc_sc)

    keys = keys_ref[0]                                          # (tk, Dp)

    # Fold 1/sqrt(D) into the small (tc, Dp) operand, cast to bf16 for the
    # MXU (cheap: tc*Dp VPU ops per step vs tc*tk*Dp MACs).
    w = (w_ref[...] * inv_sqrt_d).astype(compute_dtype)         # (tc, Dp)

    # scores = W @ keys^T, contracting on D of BOTH operands (no transpose).
    scores = lax.dot_general(
        w, keys,
        dimension_numbers=(((1,), (1,)), ((), ())),
        preferred_element_type=jnp.float32,
    )                                                           # (tc, tk) f32

    if need_l_mask:
        # Mask padded L columns; every tile keeps >= 1 valid column by
        # construction, so the running max stays finite.
        col = k * tk + lax.broadcasted_iota(jnp.int32, scores.shape, 1)
        scores = jnp.where(col < l_actual, scores, -jnp.inf)

    # Online softmax update (all f32 for stability).
    m_prev = m_sc[...]
    m_new = jnp.maximum(m_prev, jnp.max(scores, axis=-1, keepdims=True))
    corr = jnp.exp(m_prev - m_new)                              # (tc, 1)
    p = jnp.exp(scores - m_new)                                 # (tc, tk) f32
    l_sc[...] = corr * l_sc[...] + jnp.sum(p, axis=-1, keepdims=True)
    acc_sc[...] = corr * acc_sc[...] + jnp.dot(
        p.astype(compute_dtype), keys,
        preferred_element_type=jnp.float32)                     # (tc, Dp)
    m_sc[...] = m_new

    @pl.when(k == pl.num_programs(2) - 1)
    def _store():
        # Exact normalization (denominator is only (tc, 1) -> divide is free).
        out_ref[0] = (acc_sc[...] / l_sc[...]).astype(out_ref.dtype)


def attention_forward(keys, u_weight, *, c_tile=None, k_tile=512,
                      compute_dtype=jnp.bfloat16):
    """keys: (B, L, D), u_weight: (C, D)  ->  (B, C, D) in keys.dtype."""
    B, L, D = keys.shape
    C, D2 = u_weight.shape
    assert D == D2
    out_dtype = keys.dtype

    if c_tile is None:
        c_tile = _default_c_tile()

    # Lane-dense feature dim (multiple of 128) -> unmasked stores.
    d_pad = _round_up(D, 128)
    # Sublane-aligned C tiles; padded (zero) label rows are sliced off later.
    tc = min(c_tile, _round_up(C, 8))
    c_pad = _round_up(C, tc)
    # L tiles for the online-softmax axis.  tk is a multiple of 8 and divides
    # l_pad; padding per construction is < tk, so every tile has valid cols.
    tk = min(k_tile, _round_up(L, 8))
    l_pad = _round_up(L, tk)

    if c_pad != C or d_pad != D:
        u_weight = jnp.pad(u_weight, ((0, c_pad - C), (0, d_pad - D)))
    keys_k = keys
    if l_pad != L or d_pad != D:
        keys_k = jnp.pad(keys_k, ((0, 0), (0, l_pad - L), (0, d_pad - D)))
    # bf16 keys in HBM: halves the dominant B*L*D DMA stream.
    keys_k = keys_k.astype(compute_dtype)

    n_c = c_pad // tc
    n_k = l_pad // tk

    kernel = functools.partial(
        _attention_kernel,
        inv_sqrt_d=1.0 / math.sqrt(D),     # scale uses the ORIGINAL D
        l_actual=L,
        tk=tk,
        need_l_mask=(l_pad != L),
        compute_dtype=compute_dtype)

    cost = pl.CostEstimate(
        flops=4 * B * c_pad * l_pad * d_pad,          # two matmuls
        transcendentals=B * c_pad * l_pad,            # exp
        bytes_accessed=(B * l_pad * d_pad * keys_k.dtype.itemsize
                        + c_pad * d_pad * u_weight.dtype.itemsize
                        + B * c_pad * d_pad * jnp.dtype(out_dtype).itemsize),
    )

    out_padded = pl.pallas_call(
        kernel,
        out_shape=jax.ShapeDtypeStruct((B, c_pad, d_pad), out_dtype),
        grid_spec=pltpu.PrefetchScalarGridSpec(
            num_scalar_prefetch=0,
            # B and C tiles are independent ("parallel", feeds both TCs);
            # the L axis is a reduction -> innermost + "arbitrary".
            grid=(B, n_c, n_k),
            in_specs=[
                # U.weight tile: depends only on the C-tile index.
                pl.BlockSpec((tc, d_pad), lambda b, c, k: (c, 0)),
                # keys tile for (batch b, L-tile k).
                pl.BlockSpec((1, tk, d_pad), lambda b, c, k: (b, k, 0)),
            ],
            # Output block constant across k -> stays resident (accumulator).
            out_specs=pl.BlockSpec((1, tc, d_pad), lambda b, c, k: (b, c, 0)),
            scratch_shapes=[
                pltpu.VMEM((tc, 1), jnp.float32),      # running max
                pltpu.VMEM((tc, 1), jnp.float32),      # running denom
                pltpu.VMEM((tc, d_pad), jnp.float32),  # f32 accumulator
            ],
        ),
        compiler_params=pltpu.CompilerParams(
            dimension_semantics=("parallel", "parallel", "arbitrary"),
        ),
        cost_estimate=cost,
    )(u_weight, keys_k)

    if c_pad != C or d_pad != D:
        out_padded = out_padded[:, :C, :D]
    return out_padded


def reference_forward(keys, u_weight):
    # Pure-JAX f32 reference matching the PyTorch module.
    d = keys.shape[-1]
    x = jnp.swapaxes(keys, 1, 2)                                 # (B, D, L)
    scores = jnp.einsum("cd,bdl->bcl", u_weight, x,
                        precision=lax.Precision.HIGHEST)         # (B, C, L)
    scores = scores / math.sqrt(d)
    alpha = jax.nn.softmax(scores, axis=2)
    return jnp.matmul(alpha, keys, precision=lax.Precision.HIGHEST)


def _make_inputs(key, B, L, D, C):
    k_keys, k_w = jax.random.split(key)
    keys = jax.random.normal(k_keys, (B, L, D), dtype=jnp.float32)
    # Deterministic xavier_uniform_ init for U.weight (fan_in=D, fan_out=C).
    bound = math.sqrt(6.0 / (D + C))
    u_weight = jax.random.uniform(
        k_w, (C, D), dtype=jnp.float32, minval=-bound, maxval=bound)
    return keys, u_weight


if __name__ == "__main__":
    root = jax.random.PRNGKey(0)
    k1, k2, k3 = jax.random.split(root, 3)

    # bf16 MXU operands (f32 accumulation / softmax) vs. an all-f32 reference
    # -> bf16-level tolerance.  The exact (non-approx) normalization keeps the
    # error well inside this bound.
    ATOL = RTOL = 2e-2

    # Case 1: lane-dense, MXU-friendly shapes.
    B, L, D, C = 2, 64, 128, 128
    keys, u_weight = _make_inputs(k1, B, L, D, C)
    out = jax.block_until_ready(attention_forward(keys, u_weight))
    ref = reference_forward(keys, u_weight)
    assert out.shape == (B, C, D) and out.dtype == keys.dtype
    assert jnp.allclose(out, ref, atol=ATOL, rtol=RTOL), "mismatch (case 1)"

    # Case 2: toy / ragged shapes (exercises the C- and D-padding paths).
    B, L, D, C = 2, 8, 32, 10
    keys, u_weight = _make_inputs(k2, B, L, D, C)
    out = jax.block_until_ready(attention_forward(keys, u_weight))
    ref = reference_forward(keys, u_weight)
    assert out.shape == (B, C, D)
    assert jnp.allclose(out, ref, atol=ATOL, rtol=RTOL), "mismatch (case 2)"

    # Case 3: multi-tile L (exercises the online-softmax grid axis + L mask).
    B, L, D, C = 2, 200, 128, 24
    keys, u_weight = _make_inputs(k3, B, L, D, C)
    out = jax.block_until_ready(attention_forward(keys, u_weight, k_tile=64))
    ref = reference_forward(keys, u_weight)
    assert out.shape == (B, C, D)
    assert jnp.allclose(out, ref, atol=ATOL, rtol=RTOL), "mismatch (case 3)"

    print("KERNEL_OK")
</pallas_src>

<mosaic_0001>
module attributes {stable_mosaic.version = 11 : i64} {
  func.func @_attention_kernel(%arg0: i32, %arg1: i32, %arg2: i32, %arg3: memref<128x128xf32, #tpu.memory_space<vmem>>, %arg4: memref<1x64x128xbf16, #tpu.memory_space<vmem>>, %arg5: memref<1x128x128xf32, #tpu.memory_space<vmem>>, %arg6: memref<128x1xf32, #tpu.memory_space<vmem>>, %arg7: memref<128x1xf32, #tpu.memory_space<vmem>>, %arg8: memref<128x128xf32, #tpu.memory_space<vmem>>) attributes {dimension_semantics = [#tpu.dimension_semantics<parallel>, #tpu.dimension_semantics<parallel>, #tpu.dimension_semantics<arbitrary>], iteration_bounds = array<i64: 2, 1, 1>, scalar_prefetch = 0 : i64, scratch_operands = 3 : i64, tpu.core_type = #tpu.core_type<tc>, window_params = [{transform_indices = @transform_0, window_bounds = array<i64: 128, 128>}, {transform_indices = @transform_1, window_bounds = array<i64: 1, 64, 128>}, {transform_indices = @transform_2, window_bounds = array<i64: 1, 128, 128>}]} {
    %c0_i32 = arith.constant 0 : i32
    %0 = arith.cmpi eq, %arg2, %c0_i32 : i32
    %1 = arith.extui %0 : i1 to i32
    %c0_i32_0 = arith.constant 0 : i32
    %2 = arith.cmpi ne, %1, %c0_i32_0 : i32
    scf.if %2 {
      %cst_23 = arith.constant 0xFF800000 : f32
      %36 = vector.broadcast %cst_23 : f32 to vector<128x1xf32>
      %c0_24 = arith.constant 0 : index
      %c0_25 = arith.constant 0 : index
      %37 = vector.load %arg6[%c0_24, %c0_25] : memref<128x1xf32, #tpu.memory_space<vmem>>, vector<128x1xf32>
      tpu.vector_store %arg6[%c0_24, %c0_25], %36 {strides = array<i32>} : memref<128x1xf32, #tpu.memory_space<vmem>>, vector<128x1xf32>,
      %cst_26 = arith.constant 0.000000e+00 : f32
      %38 = vector.broadcast %cst_26 : f32 to vector<128x1xf32>
      %c0_27 = arith.constant 0 : index
      %c0_28 = arith.constant 0 : index
      %39 = vector.load %arg7[%c0_27, %c0_28] : memref<128x1xf32, #tpu.memory_space<vmem>>, vector<128x1xf32>
      tpu.vector_store %arg7[%c0_27, %c0_28], %38 {strides = array<i32>} : memref<128x1xf32, #tpu.memory_space<vmem>>, vector<128x1xf32>,
      %cst_29 = arith.constant 0.000000e+00 : f32
      %40 = vector.broadcast %cst_29 : f32 to vector<128x128xf32>
      %c0_30 = arith.constant 0 : index
      %c0_31 = arith.constant 0 : index
      %41 = vector.load %arg8[%c0_30, %c0_31] : memref<128x128xf32, #tpu.memory_space<vmem>>, vector<128x128xf32>
      tpu.vector_store %arg8[%c0_30, %c0_31], %40 {strides = array<i32>} : memref<128x128xf32, #tpu.memory_space<vmem>>, vector<128x128xf32>,
    } else {
    }
    %c0 = arith.constant 0 : index
    %c0_1 = arith.constant 0 : index
    %c0_2 = arith.constant 0 : index
    %3 = vector.load %arg4[%c0, %c0_1, %c0_2] : memref<1x64x128xbf16, #tpu.memory_space<vmem>>, vector<1x64x128xbf16>
    %4 = vector.shape_cast %3 : vector<1x64x128xbf16> to vector<64x128xbf16>
    %c0_3 = arith.constant 0 : index
    %c0_4 = arith.constant 0 : index
    %5 = vector.load %arg3[%c0_3, %c0_4] : memref<128x128xf32, #tpu.memory_space<vmem>>, vector<128x128xf32>
    %cst = arith.constant 0.0883883461 : f32
    %6 = vector.broadcast %cst : f32 to vector<128x128xf32>
    %7 = arith.mulf %5, %6 : vector<128x128xf32>
    %8 = arith.truncf %7 : vector<128x128xf32> to vector<128x128xbf16>
    %cst_5 = arith.constant dense<0.000000e+00> : vector<128x64xf32>
    %9 = tpu.matmul %8, %4, %cst_5 {dimension_numbers = #tpu.dot_dimension_numbers<[1], [1], [0], [0], [0, 0, 1, 0], [], []>} : vector<128x128xbf16>, vector<64x128xbf16>, vector<128x64xf32> -> vector<128x64xf32>
    %c0_6 = arith.constant 0 : index
    %c0_7 = arith.constant 0 : index
    %10 = vector.load %arg6[%c0_6, %c0_7] : memref<128x1xf32, #tpu.memory_space<vmem>>, vector<128x1xf32>
    %cst_8 = arith.constant dense<0xFF800000> : vector<128xf32>
    %11 = vector.multi_reduction <maximumf>, %9, %cst_8 [1] : vector<128x64xf32> to vector<128xf32>
    %12 = vector.shape_cast %11 : vector<128xf32> to vector<128x1xf32>
    %13 = arith.maximumf %10, %12 : vector<128x1xf32>
    %14 = arith.subf %10, %13 : vector<128x1xf32>
    %15 = math.exp %14 : vector<128x1xf32>
    %16 = vector.broadcast %13 : vector<128x1xf32> to vector<128x64xf32>
    %17 = arith.subf %9, %16 : vector<128x64xf32>
    %18 = math.exp %17 : vector<128x64xf32>
    %c0_9 = arith.constant 0 : index
    %c0_10 = arith.constant 0 : index
    %19 = vector.load %arg7[%c0_9, %c0_10] : memref<128x1xf32, #tpu.memory_space<vmem>>, vector<128x1xf32>
    %20 = arith.mulf %15, %19 : vector<128x1xf32>
    %cst_11 = arith.constant dense<0.000000e+00> : vector<128xf32>
    %21 = vector.multi_reduction <add>, %18, %cst_11 [1] : vector<128x64xf32> to vector<128xf32>
    %22 = vector.shape_cast %21 : vector<128xf32> to vector<128x1xf32>
    %23 = arith.addf %20, %22 : vector<128x1xf32>
    %c0_12 = arith.constant 0 : index
    %c0_13 = arith.constant 0 : index
    %24 = vector.load %arg7[%c0_12, %c0_13] : memref<128x1xf32, #tpu.memory_space<vmem>>, vector<128x1xf32>
    tpu.vector_store %arg7[%c0_12, %c0_13], %23 {strides = array<i32>} : memref<128x1xf32, #tpu.memory_space<vmem>>, vector<128x1xf32>,
    %c0_14 = arith.constant 0 : index
    %c0_15 = arith.constant 0 : index
    %25 = vector.load %arg8[%c0_14, %c0_15] : memref<128x128xf32, #tpu.memory_space<vmem>>, vector<128x128xf32>
    %26 = vector.broadcast %15 : vector<128x1xf32> to vector<128x128xf32>
    %27 = arith.mulf %26, %25 : vector<128x128xf32>
    %28 = arith.truncf %18 : vector<128x64xf32> to vector<128x64xbf16>
    %cst_16 = arith.constant dense<0.000000e+00> : vector<128x128xf32>
    %29 = tpu.matmul %28, %4, %cst_16 {dimension_numbers = #tpu.dot_dimension_numbers<[1], [0], [0], [1], [0, 0, 1, 1], [], []>} : vector<128x64xbf16>, vector<64x128xbf16>, vector<128x128xf32> -> vector<128x128xf32>
    %30 = arith.addf %27, %29 : vector<128x128xf32>
    %c0_17 = arith.constant 0 : index
    %c0_18 = arith.constant 0 : index
    %31 = vector.load %arg8[%c0_17, %c0_18] : memref<128x128xf32, #tpu.memory_space<vmem>>, vector<128x128xf32>
    tpu.vector_store %arg8[%c0_17, %c0_18], %30 {strides = array<i32>} : memref<128x128xf32, #tpu.memory_space<vmem>>, vector<128x128xf32>,
    %c0_19 = arith.constant 0 : index
    %c0_20 = arith.constant 0 : index
    %32 = vector.load %arg6[%c0_19, %c0_20] : memref<128x1xf32, #tpu.memory_space<vmem>>, vector<128x1xf32>
    tpu.vector_store %arg6[%c0_19, %c0_20], %13 {strides = array<i32>} : memref<128x1xf32, #tpu.memory_space<vmem>>, vector<128x1xf32>,
    %c0_i32_21 = arith.constant 0 : i32
    %33 = arith.cmpi eq, %arg2, %c0_i32_21 : i32
    %34 = arith.extui %33 : i1 to i32
    %c0_i32_22 = arith.constant 0 : i32
    %35 = arith.cmpi ne, %34, %c0_i32_22 : i32
    scf.if %35 {
      %c0_23 = arith.constant 0 : index
      %c0_24 = arith.constant 0 : index
      %36 = vector.load %arg8[%c0_23, %c0_24] : memref<128x128xf32, #tpu.memory_space<vmem>>, vector<128x128xf32>
      %c0_25 = arith.constant 0 : index
      %c0_26 = arith.constant 0 : index
      %37 = vector.load %arg7[%c0_25, %c0_26] : memref<128x1xf32, #tpu.memory_space<vmem>>, vector<128x1xf32>
      %38 = vector.broadcast %37 : vector<128x1xf32> to vector<128x128xf32>
      %39 = arith.divf %36, %38 : vector<128x128xf32>
      %c0_27 = arith.constant 0 : index
      %c0_28 = arith.constant 0 : index
      %c0_29 = arith.constant 0 : index
      %40 = vector.load %arg5[%c0_27, %c0_28, %c0_29] : memref<1x128x128xf32, #tpu.memory_space<vmem>>, vector<1x128x128xf32>
      %41 = vector.shape_cast %40 : vector<1x128x128xf32> to vector<128x128xf32>
      %42 = vector.shape_cast %39 : vector<128x128xf32> to vector<1x128x128xf32>
      tpu.vector_store %arg5[%c0_27, %c0_28, %c0_29], %42 {strides = array<i32>} : memref<1x128x128xf32, #tpu.memory_space<vmem>>, vector<1x128x128xf32>,
    } else {
    }
    return
  }
  func.func @transform_0(%arg0: i32, %arg1: i32, %arg2: i32) -> (i32, i32) {
    %c0_i32 = arith.constant 0 : i32
    %c0_i32_0 = arith.constant 0 : i32
    return %arg1, %c0_i32 : i32, i32
  }
  func.func @transform_1(%arg0: i32, %arg1: i32, %arg2: i32) -> (i32, i32, i32) {
    %c0_i32 = arith.constant 0 : i32
    %c0_i32_0 = arith.constant 0 : i32
    return %arg0, %arg2, %c0_i32 : i32, i32, i32
  }
  func.func @transform_2(%arg0: i32, %arg1: i32, %arg2: i32) -> (i32, i32, i32) {
    %c0_i32 = arith.constant 0 : i32
    %c0_i32_0 = arith.constant 0 : i32
    return %arg0, %arg1, %c0_i32 : i32, i32, i32
  }
}

</mosaic_0001>

<llo_original>
// kernel: tpu_custom_call.1
$region0: #{tpu_custom_call.1}
  #allocation0 [shape = 'u32[]', space=smem, size = 0x4, offset = 0x4, fixed_abs, tag = 'smem constant byte address 0x4 - core index']
  #allocation1 [shape = 'u32[144,128]{1,0:T(1,128)}', space=vmem, size = 0x12000, scoped, tag = 'internal scratch']
  #allocation2 [shape = 'f32[128,1]{1,0:T(8,128)}', space=vmem, size = 0x10000, scoped, tag = 'scratch operand']
  #allocation3 [shape = 'f32[128,1]{1,0:T(8,128)}', space=vmem, size = 0x10000, scoped, tag = 'scratch operand']
  #allocation4 [shape = 'f32[128,128]{1,0:T(8,128)}', space=vmem, size = 0x10000, scoped, tag = 'scratch operand']
  %s0 = inlined_call_operand.hbm [shape: f32[128,128], index: 0, kind: input, shape index: {}]
  %s1 = inlined_call_operand.hbm [shape: bf16[2,64,128], index: 1, kind: input, shape index: {}]
  %s2 = inlined_call_operand.hbm [shape: f32[2,128,128], index: 2, kind: output, shape index: {}]
  %s3 = sld [smem:[#allocation0]]
  $region57: #{tpu_custom_call.1} parent=0
    _
  %s5 = ssub.s32 1, %s3
  %s6 = scalar_select 0, %s5, %s3
  $region1: #{tpu_custom_call.1} parent=0
    #allocation5 [shape = 'u8[65536]{0}', space=vmem, size = 0x10000, scoped, tag = 'input window, operand 0, single buffered']
    #allocation6 [shape = 's32[2]{0}', space=sflag, size = 0x8, scoped, tag = 'scoped memory for tpu_custom_call.1']
    #allocation7 [shape = 's32[2]{0}', space=sflag, size = 0x8, scoped, tag = 'scoped memory for tpu_custom_call.1']
    #allocation8 [shape = 'u8[32768]{0}', space=vmem, size = 0x8000, scoped, tag = 'input window, operand 1']
    #allocation9 [shape = 's32[2]{0}', space=sflag, size = 0x8, scoped, tag = 'scoped memory for tpu_custom_call.1']
    #allocation10 [shape = 'u8[131072]{0}', space=vmem, size = 0x20000, scoped, tag = 'output window, operand 0']
    %7 = vsyncpa [#allocation6], 0
    %8 = vsyncpa [#allocation9], 0
    %s9 = scalar_lea.sflag [#allocation9], 1
    %10 = vsyncpa %s9, 0
    %11 = vsyncpa [#allocation7], 0
    %s12 = scalar_lea.sflag [#allocation7], 1
    %13 = vsyncpa %s12, 0
    loop: start=0, step=1, limit=4
    $region2: #{tpu_custom_call.1} parent=1 // loop_pre_header
      _
    $region3: #{tpu_custom_call.1} parent=1 // loop_header
      %s15 = sphi 0, %s19
      %p16 = scmp.ge.s32.totalorder %s15, 4
      %s22 = sphi 0, %s41
      %s23 = sphi 0, %s37
      %s24 = sphi 0, %s33
      %s25 = sphi 0, %s22
      %s26 = sphi 0, %s23
      %s27 = sphi 0, %s24
      %s28 = sphi 0, %s25
      %s29 = sphi 0, %s26
      %s30 = sphi 0, %s27
      %s44 = sphi 0, %s46
      %s47 = sphi 0, %s44
      %s48 = sphi 0, %s47
      %s64 = sphi 0, %s48
      %s72 = sphi 0, %s74
      %s75 = sphi 0, %s72
      %s76 = sphi 0, %s75
      %s92 = sphi 0, %s76
      %s100 = sphi 0, %s102
      %s103 = sphi 0, %s100
      %s104 = sphi 0, %s103
      %s120 = sphi 0, %s104
    $region4: #{tpu_custom_call.1} parent=1 // loop_header_branch
      %18 = sbr.rel (%p16) target = $region8
    $region5: #{tpu_custom_call.1} parent=1 // loop_body
      %s20 = ssub.s32 %s15, 1
      %s21 = ssub.s32 %s15, 2
      %s31 = sadd.s32 1, %s24
      %p32 = scmp.ge.s32.totalorder %s31, 1
      %s33 = scalar_select %p32, 0, %s31
      %s34 = sadd.s32 1, %s23
      %s35 = scalar_select %p32, %s34, %s23
      %p36 = scmp.ge.s32.totalorder %s35, 1
      %s37 = scalar_select %p36, 0, %s35
      %s38 = sadd.s32 1, %s22
      %s39 = scalar_select %p36, %s38, %s22
      %p40 = scmp.ge.s32.totalorder %s39, 2
      %s41 = scalar_select %p40, 0, %s39
      %s42 = ssub.s32 %s23, %s37
      %p43 = scmp.eq.s32.totalorder %s42, 0
      %s45 = sadd.s32 %s44, 1
      %s46 = scalar_select %p43, %s44, %s45
      %p49 = pneg %p43
      %p50 = scmp.eq.s32.totalorder %s15, 1
      %p51 = por %p49, %p50
      %p52 = scmp.ne.s32.totalorder %s44, %s47
      %p53 = scmp.eq.s32.totalorder %s15, 0
      %p54 = por %p52, %p53
      %p55 = scmp.ne.s32.totalorder %s44, %s47
      %p56 = scmp.eq.s32.totalorder %s20, 1
      %p57 = por %p55, %p56
      %p58 = scmp.ne.s32.totalorder %s47, %s48
      %p59 = scmp.eq.s32.totalorder %s20, 0
      %p60 = por %p58, %p59
      %p61 = scmp.ne.s32.totalorder %s47, %s48
      %p62 = scmp.eq.s32.totalorder %s21, 1
      %p63 = por %p61, %p62
      %p65 = scmp.ne.s32.totalorder %s48, %s64
      %p66 = scmp.eq.s32.totalorder %s21, 0
      %p67 = por %p65, %p66
      %s68 = ssub.s32 %s22, %s41
      %s69 = ssub.s32 %s24, %s33
      %s70 = sor.u32 %s68, %s69
      %p71 = scmp.eq.s32.totalorder %s70, 0
      %s73 = sadd.s32 %s72, 1
      %s74 = scalar_select %p71, %s72, %s73
      %p77 = pneg %p71
      %p78 = scmp.eq.s32.totalorder %s15, 1
      %p79 = por %p77, %p78
      %p80 = scmp.ne.s32.totalorder %s72, %s75
      %p81 = scmp.eq.s32.totalorder %s15, 0
      %p82 = por %p80, %p81
      %p83 = scmp.ne.s32.totalorder %s72, %s75
      %p84 = scmp.eq.s32.totalorder %s20, 1
      %p85 = por %p83, %p84
      %p86 = scmp.ne.s32.totalorder %s75, %s76
      %p87 = scmp.eq.s32.totalorder %s20, 0
      %p88 = por %p86, %p87
      %p89 = scmp.ne.s32.totalorder %s75, %s76
      %p90 = scmp.eq.s32.totalorder %s21, 1
      %p91 = por %p89, %p90
      %p93 = scmp.ne.s32.totalorder %s76, %s92
      %p94 = scmp.eq.s32.totalorder %s21, 0
      %p95 = por %p93, %p94
      %s96 = ssub.s32 %s22, %s41
      %s97 = ssub.s32 %s23, %s37
      %s98 = sor.u32 %s96, %s97
      %p99 = scmp.eq.s32.totalorder %s98, 0
      %s101 = sadd.s32 %s100, 1
      %s102 = scalar_select %p99, %s100, %s101
      %p105 = pneg %p99
      %p106 = scmp.eq.s32.totalorder %s15, 1
      %p107 = por %p105, %p106
      %p108 = scmp.ne.s32.totalorder %s100, %s103
      %p109 = scmp.eq.s32.totalorder %s15, 0
      %p110 = por %p108, %p109
      %p111 = scmp.ne.s32.totalorder %s100, %s103
      %p112 = scmp.eq.s32.totalorder %s20, 1
      %p113 = por %p111, %p112
      %p114 = scmp.ne.s32.totalorder %s103, %s104
      %p115 = scmp.eq.s32.totalorder %s20, 0
      %p116 = por %p114, %p115
      %p117 = scmp.ne.s32.totalorder %s103, %s104
      %p118 = scmp.eq.s32.totalorder %s21, 1
      %p119 = por %p117, %p118
      %p121 = scmp.ne.s32.totalorder %s104, %s120
      %p122 = scmp.eq.s32.totalorder %s21, 0
      %p123 = por %p121, %p122
      %p124 = scmp.le.s32.totalorder 1, %s15
      %p125 = scmp.lt.s32.totalorder %s15, 3
      %p126 = pnand %p124, %p125
      %p127 = pneg %p126
      // Predicated region
      $region9: #{tpu_custom_call.1} parent=5 // pred_check
        _
      $region10: #{tpu_custom_call.1} parent=5 // pred_check_branch
        %129 = sbr.rel (%p126) target = $region12
      $region11: #{tpu_custom_call.1} parent=5 // pred_region
        %s130 = ssub.s32 %s15, 1
        // Predicated region
        $region13: #{tpu_custom_call.1} parent=11 // pred_check
          %p131 = pneg %p60
        $region14: #{tpu_custom_call.1} parent=11 // pred_check_branch
          %133 = sbr.rel (%p131) target = $region16
        $region15: #{tpu_custom_call.1} parent=11 // pred_region
          %s134 = smul.u32 16, %s26
          %s136 = ssub.s32 2048, 2048
          %137 = vsyncadd [#allocation6], %s136
          %s138 = smul.addr %s134, 128
          %s139 = scalar_lea.hbm %s0, %s138
          %s140 = sshll.u32 [#allocation5], 4
          %s141 = int_to_ptr.vmem [resolvable:$true] %s140
          %146 = dma.hbm_to_vmem [thread:$0]  %s139, 2048, %s141, [#allocation6], 128, 128, 8
        $region16: #{tpu_custom_call.1} parent=11 // pred_fallthru
          _
      $region12: #{tpu_custom_call.1} parent=5 // pred_fallthru
        _
      %p147 = scmp.lt.s32.totalorder %s15, 2
      // Predicated region
      $region17: #{tpu_custom_call.1} parent=5 // pred_check
        %p148 = pneg %p147
      $region18: #{tpu_custom_call.1} parent=5 // pred_check_branch
        %150 = sbr.rel (%p148) target = $region20
      $region19: #{tpu_custom_call.1} parent=5 // pred_region
        // Predicated region
        $region21: #{tpu_custom_call.1} parent=19 // pred_check
          %p151 = pneg %p82
        $region22: #{tpu_custom_call.1} parent=19 // pred_check_branch
          %153 = sbr.rel (%p151) target = $region24
        $region23: #{tpu_custom_call.1} parent=19 // pred_region
          %s154 = sand.u32 %s72, 1
          %s155 = scalar_lea.sflag [#allocation9], %s154
          %s156 = sand.u32 %s72, 1
          %s157 = smul.addr %s156, 32
          %s158 = scalar_lea.vmem [#allocation8], %s157
          %s159 = smul.u32 8, %s24
          %s161 = ssub.s32 512, 512
          %162 = vsyncadd %s155, %s161
          %s163 = smul.addr %s22, 8
          %s164 = sadd.s32 %s159, %s163
          %s165 = smul.addr %s164, 64
          %s166 = scalar_lea.hbm %s1, %s165
          %s167 = sshll.u32 %s158, 4
          %s168 = int_to_ptr.vmem [resolvable:$true] %s167
          %173 = dma.hbm_to_vmem [thread:$0]  %s166, 512, %s168, %s155, 64, 64, 4
        $region24: #{tpu_custom_call.1} parent=19 // pred_fallthru
          _
      $region20: #{tpu_custom_call.1} parent=5 // pred_fallthru
        _
      %p174 = scmp.le.s32.totalorder 1, %s15
      %p175 = scmp.lt.s32.totalorder %s15, 3
      %p176 = pnand %p174, %p175
      %p177 = pneg %p176
      // Predicated region
      $region25: #{tpu_custom_call.1} parent=5 // pred_check
        _
      $region26: #{tpu_custom_call.1} parent=5 // pred_check_branch
        %179 = sbr.rel (%p176) target = $region28
      $region27: #{tpu_custom_call.1} parent=5 // pred_region
        %s180 = ssub.s32 %s15, 1
        // Predicated region
        $region29: #{tpu_custom_call.1} parent=27 // pred_check
          %p181 = pneg %p60
        $region30: #{tpu_custom_call.1} parent=27 // pred_check_branch
          %183 = sbr.rel (%p181) target = $region32
        $region31: #{tpu_custom_call.1} parent=27 // pred_region
          %184 = dma.done [#allocation6], 2048
        $region32: #{tpu_custom_call.1} parent=27 // pred_fallthru
          _
        %s185 = sand.u32 %s75, 1
        %s186 = scalar_lea.sflag [#allocation9], %s185
        %s187 = sand.u32 %s75, 1
        %s188 = smul.addr %s187, 32
        %s189 = scalar_lea.vmem [#allocation8], %s188
        // Predicated region
        $region33: #{tpu_custom_call.1} parent=27 // pred_check
          %p190 = pneg %p88
        $region34: #{tpu_custom_call.1} parent=27 // pred_check_branch
          %192 = sbr.rel (%p190) target = $region36
        $region35: #{tpu_custom_call.1} parent=27 // pred_region
          %193 = dma.done %s186, 512
        $region36: #{tpu_custom_call.1} parent=27 // pred_fallthru
          _
        %p194 = pneg %p60
        %p195 = pneg %p57
        %s196 = sand.u32 %s75, 1
        %s197 = scalar_lea.sflag [#allocation9], %s196
        %s198 = sand.u32 %s75, 1
        %s199 = smul.addr %s198, 32
        %s200 = scalar_lea.vmem [#allocation8], %s199
        %p201 = pneg %p88
        %p202 = pneg %p85
        %p203 = pneg %p116
        %p204 = pneg %p113
        %s205 = sand.u32 %s103, 1
        %s206 = scalar_lea.sflag [#allocation7], %s205
        %s207 = sand.u32 %s103, 1
        %s208 = smul.addr %s207, 128
        %s209 = scalar_lea.vmem [#allocation10], %s208
        %s210 = smul.u32 16, %s26
        %s211 = smul.u32 8, %s27
        %s212 = smul.u32 16, %s26
        %p214 = scmp.eq.s32.totalorder %s27, 0
        // Predicated region
        $region37: #{tpu_custom_call.1} parent=27 // pred_check
          %p215 = pneg %p214
        $region38: #{tpu_custom_call.1} parent=27 // pred_check_branch
          %217 = sbr.rel (%p215) target = $region40
        $region39: #{tpu_custom_call.1} parent=27 // pred_region
          %vm218 = vcmask 7168
          %219 = vst.msk [vmem:[#allocation2] sm:$0xff] %vm218, -inf
          %220 = vst.msk [vmem:[#allocation2 + $0x8] sm:$0xff] %vm218, -inf
          %221 = vst.msk [vmem:[#allocation2 + $0x10] sm:$0xff] %vm218, -inf
          %222 = vst.msk [vmem:[#allocation2 + $0x18] sm:$0xff] %vm218, -inf
          %223 = vst.msk [vmem:[#allocation2 + $0x20] sm:$0xff] %vm218, -inf
          %224 = vst.msk [vmem:[#allocation2 + $0x28] sm:$0xff] %vm218, -inf
          %225 = vst.msk [vmem:[#allocation2 + $0x30] sm:$0xff] %vm218, -inf
          %226 = vst.msk [vmem:[#allocation2 + $0x38] sm:$0xff] %vm218, -inf
          %227 = vst.msk [vmem:[#allocation2 + $0x40] sm:$0xff] %vm218, -inf
          %228 = vst.msk [vmem:[#allocation2 + $0x48] sm:$0xff] %vm218, -inf
          %229 = vst.msk [vmem:[#allocation2 + $0x50] sm:$0xff] %vm218, -inf
          %230 = vst.msk [vmem:[#allocation2 + $0x58] sm:$0xff] %vm218, -inf
          %231 = vst.msk [vmem:[#allocation2 + $0x60] sm:$0xff] %vm218, -inf
          %232 = vst.msk [vmem:[#allocation2 + $0x68] sm:$0xff] %vm218, -inf
          %233 = vst.msk [vmem:[#allocation2 + $0x70] sm:$0xff] %vm218, -inf
          %234 = vst.msk [vmem:[#allocation2 + $0x78] sm:$0xff] %vm218, -inf
          %235 = vst.msk [vmem:[#allocation3] sm:$0xff] %vm218, 0.0
          %236 = vst.msk [vmem:[#allocation3 + $0x8] sm:$0xff] %vm218, 0.0
          %237 = vst.msk [vmem:[#allocation3 + $0x10] sm:$0xff] %vm218, 0.0
          %238 = vst.msk [vmem:[#allocation3 + $0x18] sm:$0xff] %vm218, 0.0
          %239 = vst.msk [vmem:[#allocation3 + $0x20] sm:$0xff] %vm218, 0.0
          %240 = vst.msk [vmem:[#allocation3 + $0x28] sm:$0xff] %vm218, 0.0
          %241 = vst.msk [vmem:[#allocation3 + $0x30] sm:$0xff] %vm218, 0.0
          %242 = vst.msk [vmem:[#allocation3 + $0x38] sm:$0xff] %vm218, 0.0
          %243 = vst.msk [vmem:[#allocation3 + $0x40] sm:$0xff] %vm218, 0.0
          %244 = vst.msk [vmem:[#allocation3 + $0x48] sm:$0xff] %vm218, 0.0
          %245 = vst.msk [vmem:[#allocation3 + $0x50] sm:$0xff] %vm218, 0.0
          %246 = vst.msk [vmem:[#allocation3 + $0x58] sm:$0xff] %vm218, 0.0
          %247 = vst.msk [vmem:[#allocation3 + $0x60] sm:$0xff] %vm218, 0.0
          %248 = vst.msk [vmem:[#allocation3 + $0x68] sm:$0xff] %vm218, 0.0
          %249 = vst.msk [vmem:[#allocation3 + $0x70] sm:$0xff] %vm218, 0.0
          %250 = vst.msk [vmem:[#allocation3 + $0x78] sm:$0xff] %vm218, 0.0
          %251 = vst [vmem:[#allocation4] sm:$0xff] 0.0
          %252 = vst [vmem:[#allocation4 + $0x8] sm:$0xff] 0.0
          %253 = vst [vmem:[#allocation4 + $0x10] sm:$0xff] 0.0
          %254 = vst [vmem:[#allocation4 + $0x18] sm:$0xff] 0.0
          %255 = vst [vmem:[#allocation4 + $0x20] sm:$0xff] 0.0
          %256 = vst [vmem:[#allocation4 + $0x28] sm:$0xff] 0.0
          %257 = vst [vmem:[#allocation4 + $0x30] sm:$0xff] 0.0
          %258 = vst [vmem:[#allocation4 + $0x38] sm:$0xff] 0.0
          %259 = vst [vmem:[#allocation4 + $0x40] sm:$0xff] 0.0
          %260 = vst [vmem:[#allocation4 + $0x48] sm:$0xff] 0.0
          %261 = vst [vmem:[#allocation4 + $0x50] sm:$0xff] 0.0
          %262 = vst [vmem:[#allocation4 + $0x58] sm:$0xff] 0.0
          %263 = vst [vmem:[#allocation4 + $0x60] sm:$0xff] 0.0
          %264 = vst [vmem:[#allocation4 + $0x68] sm:$0xff] 0.0
          %265 = vst [vmem:[#allocation4 + $0x70] sm:$0xff] 0.0
          %266 = vst [vmem:[#allocation4 + $0x78] sm:$0xff] 0.0
        $region40: #{tpu_custom_call.1} parent=27 // pred_fallthru
          _
        %v267 = vld [vmem:[%s189] sm:$0xf]
        %v268 = vld [vmem:[%s189 + $0x4] sm:$0xf]
        %v269 = vld [vmem:[%s189 + $0x8] sm:$0xf]
        %v270 = vld [vmem:[%s189 + $0xc] sm:$0xf]
        %v271 = vld [vmem:[%s189 + $0x10] sm:$0xf]
        %v272 = vld [vmem:[%s189 + $0x14] sm:$0xf]
        %v273 = vld [vmem:[%s189 + $0x18] sm:$0xf]
        %v274 = vld [vmem:[%s189 + $0x1c] sm:$0xf]
        %v275 = vld [vmem:[#allocation5] sm:$0xff]
        %v276 = vld [vmem:[#allocation5 + $0x8] sm:$0xff]
        %v277 = vld [vmem:[#allocation5 + $0x10] sm:$0xff]
        %v278 = vld [vmem:[#allocation5 + $0x18] sm:$0xff]
        %v279 = vld [vmem:[#allocation5 + $0x20] sm:$0xff]
        %v280 = vld [vmem:[#allocation5 + $0x28] sm:$0xff]
        %v281 = vld [vmem:[#allocation5 + $0x30] sm:$0xff]
        %v282 = vld [vmem:[#allocation5 + $0x38] sm:$0xff]
        %v283 = vld [vmem:[#allocation5 + $0x40] sm:$0xff]
        %v284 = vld [vmem:[#allocation5 + $0x48] sm:$0xff]
        %v285 = vld [vmem:[#allocation5 + $0x50] sm:$0xff]
        %v286 = vld [vmem:[#allocation5 + $0x58] sm:$0xff]
        %v287 = vld [vmem:[#allocation5 + $0x60] sm:$0xff]
        %v288 = vld [vmem:[#allocation5 + $0x68] sm:$0xff]
        %v289 = vld [vmem:[#allocation5 + $0x70] sm:$0xff]
        %v290 = vld [vmem:[#allocation5 + $0x78] sm:$0xff]
        %v291 = vmul.f32 %v275, 0.088388346
        %v292 = vmul.f32 %v276, 0.088388346
        %v293 = vmul.f32 %v277, 0.088388346
        %v294 = vmul.f32 %v278, 0.088388346
        %v295 = vmul.f32 %v279, 0.088388346
        %v296 = vmul.f32 %v280, 0.088388346
        %v297 = vmul.f32 %v281, 0.088388346
        %v298 = vmul.f32 %v282, 0.088388346
        %v299 = vmul.f32 %v283, 0.088388346
        %v300 = vmul.f32 %v284, 0.088388346
        %v301 = vmul.f32 %v285, 0.088388346
        %v302 = vmul.f32 %v286, 0.088388346
        %v303 = vmul.f32 %v287, 0.088388346
        %v304 = vmul.f32 %v288, 0.088388346
        %v305 = vmul.f32 %v289, 0.088388346
        %v306 = vmul.f32 %v290, 0.088388346
        %v307 = vpack.c.bf16 %v292, %v291
        %v308 = vpack.c.bf16 %v294, %v293
        %v309 = vpack.c.bf16 %v296, %v295
        %v310 = vpack.c.bf16 %v298, %v297
        %v311 = vpack.c.bf16 %v300, %v299
        %v312 = vpack.c.bf16 %v302, %v301
        %v313 = vpack.c.bf16 %v304, %v303
        %v314 = vpack.c.bf16 %v306, %v305
        %v323 = vunpack.c.l.b16 %v267
        %v324 = vunpack.c.l.b16 %v268
        %v325 = vunpack.c.l.b16 %v269
        %v326 = vunpack.c.l.b16 %v270
        %v327 = vunpack.c.l.b16 %v271
        %v328 = vunpack.c.l.b16 %v272
        %v329 = vunpack.c.l.b16 %v273
        %v330 = vunpack.c.l.b16 %v274
        %v331 = vpack.c.b16 %v324, %v323
        %v332 = vpack.c.b16 %v326, %v325
        %v333 = vpack.c.b16 %v328, %v327
        %v334 = vpack.c.b16 %v330, %v329
        %339 = vmatprep.subr.bf16.mxu0 0
        %340 = vmatpush1.bf16.xpose.msra.mxu0 %v331
        %341 = vmatprep.subr.bf16.mxu0 0
        %342 = vmatpush1.bf16.xpose.msra.mxu0 %v332
        %343 = vmatprep.subr.bf16.mxu0 0
        %344 = vmatpush1.bf16.xpose.msra.mxu0 %v333
        %345 = vmatprep.subr.bf16.mxu0 0
        %346 = vmatpush1.bf16.xpose.msra.mxu0 %v334
        %347 = vmatprep.subr.bf16.mxu0 0
        %348 = vmatpush1.bf16.xpose.msra.mxu0 0
        %349 = vmatprep.subr.bf16.mxu0 0
        %350 = vmatpush1.bf16.xpose.msra.mxu0 0
        %351 = vmatprep.subr.bf16.mxu0 0
        %352 = vmatpush1.bf16.xpose.msra.mxu0 0
        %353 = vmatprep.subr.bf16.mxu0 0
        %354 = vmatpush1.bf16.xpose.msra.mxu0 0
        %355 = vmatprep.subr.bf16.mxu0 0
        %356 = vmatpush1.bf16.xpose.msra.mxu0 0
        %357 = vmatprep.subr.bf16.mxu0 0
        %358 = vmatpush1.bf16.xpose.msra.mxu0 0
        %359 = vmatprep.subr.bf16.mxu0 0
        %360 = vmatpush1.bf16.xpose.msra.mxu0 0
        %361 = vmatprep.subr.bf16.mxu0 0
        %362 = vmatpush1.bf16.xpose.msra.mxu0 0
        %363 = vmatprep.subr.bf16.mxu0 0
        %364 = vmatpush1.bf16.xpose.msra.mxu0 0
        %365 = vmatprep.subr.bf16.mxu0 0
        %366 = vmatpush1.bf16.xpose.msra.mxu0 0
        %367 = vmatprep.subr.bf16.mxu0 0
        %368 = vmatpush1.bf16.xpose.msra.mxu0 0
        %369 = vmatprep.subr.bf16.mxu0 0
        %370 = vmatpush1.bf16.xpose.msra.mxu0 0
        %371 = vmatprep.mubr.bf16.mxu0 0
        %372 = vmatmul.mubr.bf16.gmra.mrb[0].mxu0 %v307
        %v373 = vpop.f32.mrb[0].mxu0
        %v374 = vadd.f32 0.0, %v373
        %v375 = vpop.f32.mrb[0].mxu0
        %v376 = vpop.f32.mrb[0].mxu0
        %v377 = vadd.f32 0.0, %v376
        %v378 = vpop.f32.mrb[0].mxu0
        %379 = vmatprep.mubr.bf16.mxu0 0
        %380 = vmatmul.mubr.bf16.gmra.mrb[0].mxu0 %v308
        %v381 = vpop.f32.mrb[0].mxu0
        %v382 = vadd.f32 0.0, %v381
        %v383 = vpop.f32.mrb[0].mxu0
        %v384 = vpop.f32.mrb[0].mxu0
        %v385 = vadd.f32 0.0, %v384
        %v386 = vpop.f32.mrb[0].mxu0
        %387 = vmatprep.mubr.bf16.mxu0 0
        %388 = vmatmul.mubr.bf16.gmra.mrb[0].mxu0 %v309
        %v389 = vpop.f32.mrb[0].mxu0
        %v390 = vadd.f32 0.0, %v389
        %v391 = vpop.f32.mrb[0].mxu0
        %v392 = vpop.f32.mrb[0].mxu0
        %v393 = vadd.f32 0.0, %v392
        %v394 = vpop.f32.mrb[0].mxu0
        %395 = vmatprep.mubr.bf16.mxu0 0
        %396 = vmatmul.mubr.bf16.gmra.mrb[0].mxu0 %v310
        %v397 = vpop.f32.mrb[0].mxu0
        %v398 = vadd.f32 0.0, %v397
        %v399 = vpop.f32.mrb[0].mxu0
        %v400 = vpop.f32.mrb[0].mxu0
        %v401 = vadd.f32 0.0, %v400
        %v402 = vpop.f32.mrb[0].mxu0
        %403 = vmatprep.mubr.bf16.mxu0 0
        %404 = vmatmul.mubr.bf16.gmra.mrb[0].mxu0 %v311
        %v405 = vpop.f32.mrb[0].mxu0
        %v406 = vadd.f32 0.0, %v405
        %v407 = vpop.f32.mrb[0].mxu0
        %v408 = vpop.f32.mrb[0].mxu0
        %v409 = vadd.f32 0.0, %v408
        %v410 = vpop.f32.mrb[0].mxu0
        %411 = vmatprep.mubr.bf16.mxu0 0
        %412 = vmatmul.mubr.bf16.gmra.mrb[0].mxu0 %v312
        %v413 = vpop.f32.mrb[0].mxu0
        %v414 = vadd.f32 0.0, %v413
        %v415 = vpop.f32.mrb[0].mxu0
        %v416 = vpop.f32.mrb[0].mxu0
        %v417 = vadd.f32 0.0, %v416
        %v418 = vpop.f32.mrb[0].mxu0
        %419 = vmatprep.mubr.bf16.mxu0 0
        %420 = vmatmul.mubr.bf16.gmra.mrb[0].mxu0 %v313
        %v421 = vpop.f32.mrb[0].mxu0
        %v422 = vadd.f32 0.0, %v421
        %v423 = vpop.f32.mrb[0].mxu0
        %v424 = vpop.f32.mrb[0].mxu0
        %v425 = vadd.f32 0.0, %v424
        %v426 = vpop.f32.mrb[0].mxu0
        %427 = vmatprep.mubr.bf16.mxu0 0
        %428 = vmatmul.mubr.bf16.gmra.mrb[0].mxu0 %v314
        %v429 = vpop.f32.mrb[0].mxu0
        %v430 = vadd.f32 0.0, %v429
        %v431 = vpop.f32.mrb[0].mxu0
        %v432 = vpop.f32.mrb[0].mxu0
        %v433 = vadd.f32 0.0, %v432
        %v434 = vpop.f32.mrb[0].mxu0
        %435 = vdwg.mxu0
        %v436 = vld [vmem:[#allocation2] sm:$0xff]
        %v437 = vld [vmem:[#allocation2 + $0x8] sm:$0xff]
        %v438 = vld [vmem:[#allocation2 + $0x10] sm:$0xff]
        %v439 = vld [vmem:[#allocation2 + $0x18] sm:$0xff]
        %v440 = vld [vmem:[#allocation2 + $0x20] sm:$0xff]
        %v441 = vld [vmem:[#allocation2 + $0x28] sm:$0xff]
        %v442 = vld [vmem:[#allocation2 + $0x30] sm:$0xff]
        %v443 = vld [vmem:[#allocation2 + $0x38] sm:$0xff]
        %v444 = vld [vmem:[#allocation2 + $0x40] sm:$0xff]
        %v445 = vld [vmem:[#allocation2 + $0x48] sm:$0xff]
        %v446 = vld [vmem:[#allocation2 + $0x50] sm:$0xff]
        %v447 = vld [vmem:[#allocation2 + $0x58] sm:$0xff]
        %v448 = vld [vmem:[#allocation2 + $0x60] sm:$0xff]
        %v449 = vld [vmem:[#allocation2 + $0x68] sm:$0xff]
        %v450 = vld [vmem:[#allocation2 + $0x70] sm:$0xff]
        %v451 = vld [vmem:[#allocation2 + $0x78] sm:$0xff]
        %vm452 = vcmask 523264
        %v453 = vsel %vm452, %v374, -inf
        %454 = vmax.xlane.f32.xlu0 %v453
        %v455 = vpop.xlane.xlu0 %454
        %v456 = vsel %vm452, %v377, -inf
        %457 = vmax.xlane.f32.xlu0 %v456
        %v458 = vpop.xlane.xlu0 %457
        %v459 = vsel %vm452, %v382, -inf
        %460 = vmax.xlane.f32.xlu0 %v459
        %v461 = vpop.xlane.xlu0 %460
        %v462 = vsel %vm452, %v385, -inf
        %463 = vmax.xlane.f32.xlu0 %v462
        %v464 = vpop.xlane.xlu0 %463
        %v465 = vsel %vm452, %v390, -inf
        %466 = vmax.xlane.f32.xlu0 %v465
        %v467 = vpop.xlane.xlu0 %466
        %v468 = vsel %vm452, %v393, -inf
        %469 = vmax.xlane.f32.xlu0 %v468
        %v470 = vpop.xlane.xlu0 %469
        %v471 = vsel %vm452, %v398, -inf
        %472 = vmax.xlane.f32.xlu0 %v471
        %v473 = vpop.xlane.xlu0 %472
        %v474 = vsel %vm452, %v401, -inf
        %475 = vmax.xlane.f32.xlu0 %v474
        %v476 = vpop.xlane.xlu0 %475
        %v477 = vsel %vm452, %v406, -inf
        %478 = vmax.xlane.f32.xlu0 %v477
        %v479 = vpop.xlane.xlu0 %478
        %v480 = vsel %vm452, %v409, -inf
        %481 = vmax.xlane.f32.xlu0 %v480
        %v482 = vpop.xlane.xlu0 %481
        %v483 = vsel %vm452, %v414, -inf
        %484 = vmax.xlane.f32.xlu0 %v483
        %v485 = vpop.xlane.xlu0 %484
        %v486 = vsel %vm452, %v417, -inf
        %487 = vmax.xlane.f32.xlu0 %v486
        %v488 = vpop.xlane.xlu0 %487
        %v489 = vsel %vm452, %v422, -inf
        %490 = vmax.xlane.f32.xlu0 %v489
        %v491 = vpop.xlane.xlu0 %490
        %v492 = vsel %vm452, %v425, -inf
        %493 = vmax.xlane.f32.xlu0 %v492
        %v494 = vpop.xlane.xlu0 %493
        %v495 = vsel %vm452, %v430, -inf
        %496 = vmax.xlane.f32.xlu0 %v495
        %v497 = vpop.xlane.xlu0 %496
        %v498 = vsel %vm452, %v433, -inf
        %499 = vmax.xlane.f32.xlu0 %v498
        %v500 = vpop.xlane.xlu0 %499
        %v501 = vmax.f32 %v436, %v455
        %v502 = vmax.f32 %v437, %v458
        %v503 = vmax.f32 %v438, %v461
        %v504 = vmax.f32 %v439, %v464
        %v505 = vmax.f32 %v440, %v467
        %v506 = vmax.f32 %v441, %v470
        %v507 = vmax.f32 %v442, %v473
        %v508 = vmax.f32 %v443, %v476
        %v509 = vmax.f32 %v444, %v479
        %v510 = vmax.f32 %v445, %v482
        %v511 = vmax.f32 %v446, %v485
        %v512 = vmax.f32 %v447, %v488
        %v513 = vmax.f32 %v448, %v491
        %v514 = vmax.f32 %v449, %v494
        %v515 = vmax.f32 %v450, %v497
        %v516 = vmax.f32 %v451, %v500
        %v517 = vsub.f32 %v436, %v501
        %v518 = vsub.f32 %v437, %v502
        %v519 = vsub.f32 %v438, %v503
        %v520 = vsub.f32 %v439, %v504
        %v521 = vsub.f32 %v440, %v505
        %v522 = vsub.f32 %v441, %v506
        %v523 = vsub.f32 %v442, %v507
        %v524 = vsub.f32 %v443, %v508
        %v525 = vsub.f32 %v444, %v509
        %v526 = vsub.f32 %v445, %v510
        %v527 = vsub.f32 %v446, %v511
        %v528 = vsub.f32 %v447, %v512
        %v529 = vsub.f32 %v448, %v513
        %v530 = vsub.f32 %v449, %v514
        %v531 = vsub.f32 %v450, %v515
        %v532 = vsub.f32 %v451, %v516
        %v533 = vmul.f32 %v517, 1.442695
        %v534 = vpow.pop %v533
        %v535 = vmul.f32 %v518, 1.442695
        %v536 = vpow.pop %v535
        %v537 = vmul.f32 %v519, 1.442695
        %v538 = vpow.pop %v537
        %v539 = vmul.f32 %v520, 1.442695
        %v540 = vpow.pop %v539
        %v541 = vmul.f32 %v521, 1.442695
        %v542 = vpow.pop %v541
        %v543 = vmul.f32 %v522, 1.442695
        %v544 = vpow.pop %v543
        %v545 = vmul.f32 %v523, 1.442695
        %v546 = vpow.pop %v545
        %v547 = vmul.f32 %v524, 1.442695
        %v548 = vpow.pop %v547
        %v549 = vmul.f32 %v525, 1.442695
        %v550 = vpow.pop %v549
        %v551 = vmul.f32 %v526, 1.442695
        %v552 = vpow.pop %v551
        %v553 = vmul.f32 %v527, 1.442695
        %v554 = vpow.pop %v553
        %v555 = vmul.f32 %v528, 1.442695
        %v556 = vpow.pop %v555
        %v557 = vmul.f32 %v529, 1.442695
        %v558 = vpow.pop %v557
        %v559 = vmul.f32 %v530, 1.442695
        %v560 = vpow.pop %v559
        %v561 = vmul.f32 %v531, 1.442695
        %v562 = vpow.pop %v561
        %v563 = vmul.f32 %v532, 1.442695
        %v564 = vpow.pop %v563
        %566 = vset.pattern.permute.xlu0 0
        %567 = vperm.xlu0 %566, %v501
        %v568 = vpop.permute.xlu0 %567
        %571 = vset.pattern.permute.xlu0 0
        %572 = vperm.xlu0 %571, %v502
        %v573 = vpop.permute.xlu0 %572
        %576 = vset.pattern.permute.xlu0 0
        %577 = vperm.xlu0 %576, %v503
        %v578 = vpop.permute.xlu0 %577
        %581 = vset.pattern.permute.xlu0 0
        %582 = vperm.xlu0 %581, %v504
        %v583 = vpop.permute.xlu0 %582
        %586 = vset.pattern.permute.xlu0 0
        %587 = vperm.xlu0 %586, %v505
        %v588 = vpop.permute.xlu0 %587
        %591 = vset.pattern.permute.xlu0 0
        %592 = vperm.xlu0 %591, %v506
        %v593 = vpop.permute.xlu0 %592
        %596 = vset.pattern.permute.xlu0 0
        %597 = vperm.xlu0 %596, %v507
        %v598 = vpop.permute.xlu0 %597
        %601 = vset.pattern.permute.xlu0 0
        %602 = vperm.xlu0 %601, %v508
        %v603 = vpop.permute.xlu0 %602
        %606 = vset.pattern.permute.xlu0 0
        %607 = vperm.xlu0 %606, %v509
        %v608 = vpop.permute.xlu0 %607
        %611 = vset.pattern.permute.xlu0 0
        %612 = vperm.xlu0 %611, %v510
        %v613 = vpop.permute.xlu0 %612
        %616 = vset.pattern.permute.xlu0 0
        %617 = vperm.xlu0 %616, %v511
        %v618 = vpop.permute.xlu0 %617
        %621 = vset.pattern.permute.xlu0 0
        %622 = vperm.xlu0 %621, %v512
        %v623 = vpop.permute.xlu0 %622
        %626 = vset.pattern.permute.xlu0 0
        %627 = vperm.xlu0 %626, %v513
        %v628 = vpop.permute.xlu0 %627
        %631 = vset.pattern.permute.xlu0 0
        %632 = vperm.xlu0 %631, %v514
        %v633 = vpop.permute.xlu0 %632
        %636 = vset.pattern.permute.xlu0 0
        %637 = vperm.xlu0 %636, %v515
        %v638 = vpop.permute.xlu0 %637
        %641 = vset.pattern.permute.xlu0 0
        %642 = vperm.xlu0 %641, %v516
        %v643 = vpop.permute.xlu0 %642
        %v645 = vsub.f32 %v374, %v568
        %v646 = vsub.f32 %v377, %v573
        %v647 = vsub.f32 %v382, %v578
        %v648 = vsub.f32 %v385, %v583
        %v649 = vsub.f32 %v390, %v588
        %v650 = vsub.f32 %v393, %v593
        %v651 = vsub.f32 %v398, %v598
        %v652 = vsub.f32 %v401, %v603
        %v653 = vsub.f32 %v406, %v608
        %v654 = vsub.f32 %v409, %v613
        %v655 = vsub.f32 %v414, %v618
        %v656 = vsub.f32 %v417, %v623
        %v657 = vsub.f32 %v422, %v628
        %v658 = vsub.f32 %v425, %v633
        %v659 = vsub.f32 %v430, %v638
        %v660 = vsub.f32 %v433, %v643
        %v661 = vmul.f32 %v645, 1.442695
        %v662 = vpow.pop %v661
        %v663 = vmul.f32 %v646, 1.442695
        %v664 = vpow.pop %v663
        %v665 = vmul.f32 %v647, 1.442695
        %v666 = vpow.pop %v665
        %v667 = vmul.f32 %v648, 1.442695
        %v668 = vpow.pop %v667
        %v669 = vmul.f32 %v649, 1.442695
        %v670 = vpow.pop %v669
        %v671 = vmul.f32 %v650, 1.442695
        %v672 = vpow.pop %v671
        %v673 = vmul.f32 %v651, 1.442695
        %v674 = vpow.pop %v673
        %v675 = vmul.f32 %v652, 1.442695
        %v676 = vpow.pop %v675
        %v677 = vmul.f32 %v653, 1.442695
        %v678 = vpow.pop %v677
        %v679 = vmul.f32 %v654, 1.442695
        %v680 = vpow.pop %v679
        %v681 = vmul.f32 %v655, 1.442695
        %v682 = vpow.pop %v681
        %v683 = vmul.f32 %v656, 1.442695
        %v684 = vpow.pop %v683
        %v685 = vmul.f32 %v657, 1.442695
        %v686 = vpow.pop %v685
        %v687 = vmul.f32 %v658, 1.442695
        %v688 = vpow.pop %v687
        %v689 = vmul.f32 %v659, 1.442695
        %v690 = vpow.pop %v689
        %v691 = vmul.f32 %v660, 1.442695
        %v692 = vpow.pop %v691
        %v693 = vld [vmem:[#allocation3] sm:$0xff]
        %v694 = vld [vmem:[#allocation3 + $0x8] sm:$0xff]
        %v695 = vld [vmem:[#allocation3 + $0x10] sm:$0xff]
        %v696 = vld [vmem:[#allocation3 + $0x18] sm:$0xff]
        %v697 = vld [vmem:[#allocation3 + $0x20] sm:$0xff]
        %v698 = vld [vmem:[#allocation3 + $0x28] sm:$0xff]
        %v699 = vld [vmem:[#allocation3 + $0x30] sm:$0xff]
        %v700 = vld [vmem:[#allocation3 + $0x38] sm:$0xff]
        %v701 = vld [vmem:[#allocation3 + $0x40] sm:$0xff]
        %v702 = vld [vmem:[#allocation3 + $0x48] sm:$0xff]
        %v703 = vld [vmem:[#allocation3 + $0x50] sm:$0xff]
        %v704 = vld [vmem:[#allocation3 + $0x58] sm:$0xff]
        %v705 = vld [vmem:[#allocation3 + $0x60] sm:$0xff]
        %v706 = vld [vmem:[#allocation3 + $0x68] sm:$0xff]
        %v707 = vld [vmem:[#allocation3 + $0x70] sm:$0xff]
        %v708 = vld [vmem:[#allocation3 + $0x78] sm:$0xff]
        %v709 = vmul.f32 %v534, %v693
        %v710 = vmul.f32 %v536, %v694
        %v711 = vmul.f32 %v538, %v695
        %v712 = vmul.f32 %v540, %v696
        %v713 = vmul.f32 %v542, %v697
        %v714 = vmul.f32 %v544, %v698
        %v715 = vmul.f32 %v546, %v699
        %v716 = vmul.f32 %v548, %v700
        %v717 = vmul.f32 %v550, %v701
        %v718 = vmul.f32 %v552, %v702
        %v719 = vmul.f32 %v554, %v703
        %v720 = vmul.f32 %v556, %v704
        %v721 = vmul.f32 %v558, %v705
        %v722 = vmul.f32 %v560, %v706
        %v723 = vmul.f32 %v562, %v707
        %v724 = vmul.f32 %v564, %v708
        %v725 = vsel %vm452, %v662, 0.0
        %726 = vadd.xlane.f32.xlu0 %v725
        %v727 = vpop.xlane.xlu0 %726
        %v728 = vsel %vm452, %v664, 0.0
        %729 = vadd.xlane.f32.xlu0 %v728
        %v730 = vpop.xlane.xlu0 %729
        %v731 = vsel %vm452, %v666, 0.0
        %732 = vadd.xlane.f32.xlu0 %v731
        %v733 = vpop.xlane.xlu0 %732
        %v734 = vsel %vm452, %v668, 0.0
        %735 = vadd.xlane.f32.xlu0 %v734
        %v736 = vpop.xlane.xlu0 %735
        %v737 = vsel %vm452, %v670, 0.0
        %738 = vadd.xlane.f32.xlu0 %v737
        %v739 = vpop.xlane.xlu0 %738
        %v740 = vsel %vm452, %v672, 0.0
        %741 = vadd.xlane.f32.xlu0 %v740
        %v742 = vpop.xlane.xlu0 %741
        %v743 = vsel %vm452, %v674, 0.0
        %744 = vadd.xlane.f32.xlu0 %v743
        %v745 = vpop.xlane.xlu0 %744
        %v746 = vsel %vm452, %v676, 0.0
        %747 = vadd.xlane.f32.xlu0 %v746
        %v748 = vpop.xlane.xlu0 %747
        %v749 = vsel %vm452, %v678, 0.0
        %750 = vadd.xlane.f32.xlu0 %v749
        %v751 = vpop.xlane.xlu0 %750
        %v752 = vsel %vm452, %v680, 0.0
        %753 = vadd.xlane.f32.xlu0 %v752
        %v754 = vpop.xlane.xlu0 %753
        %v755 = vsel %vm452, %v682, 0.0
        %756 = vadd.xlane.f32.xlu0 %v755
        %v757 = vpop.xlane.xlu0 %756
        %v758 = vsel %vm452, %v684, 0.0
        %759 = vadd.xlane.f32.xlu0 %v758
        %v760 = vpop.xlane.xlu0 %759
        %v761 = vsel %vm452, %v686, 0.0
        %762 = vadd.xlane.f32.xlu0 %v761
        %v763 = vpop.xlane.xlu0 %762
        %v764 = vsel %vm452, %v688, 0.0
        %765 = vadd.xlane.f32.xlu0 %v764
        %v766 = vpop.xlane.xlu0 %765
        %v767 = vsel %vm452, %v690, 0.0
        %768 = vadd.xlane.f32.xlu0 %v767
        %v769 = vpop.xlane.xlu0 %768
        %v770 = vsel %vm452, %v692, 0.0
        %771 = vadd.xlane.f32.xlu0 %v770
        %v772 = vpop.xlane.xlu0 %771
        %v773 = vadd.f32 %v709, %v727
        %v774 = vadd.f32 %v710, %v730
        %v775 = vadd.f32 %v711, %v733
        %v776 = vadd.f32 %v712, %v736
        %v777 = vadd.f32 %v713, %v739
        %v778 = vadd.f32 %v714, %v742
        %v779 = vadd.f32 %v715, %v745
        %v780 = vadd.f32 %v716, %v748
        %v781 = vadd.f32 %v717, %v751
        %v782 = vadd.f32 %v718, %v754
        %v783 = vadd.f32 %v719, %v757
        %v784 = vadd.f32 %v720, %v760
        %v785 = vadd.f32 %v721, %v763
        %v786 = vadd.f32 %v722, %v766
        %v787 = vadd.f32 %v723, %v769
        %v788 = vadd.f32 %v724, %v772
        %vm789 = vcmask 7168
        %790 = vst.msk [vmem:[#allocation3] sm:$0xff] %vm789, %v773
        %791 = vst.msk [vmem:[#allocation3 + $0x8] sm:$0xff] %vm789, %v774
        %792 = vst.msk [vmem:[#allocation3 + $0x10] sm:$0xff] %vm789, %v775
        %793 = vst.msk [vmem:[#allocation3 + $0x18] sm:$0xff] %vm789, %v776
        %794 = vst.msk [vmem:[#allocation3 + $0x20] sm:$0xff] %vm789, %v777
        %795 = vst.msk [vmem:[#allocation3 + $0x28] sm:$0xff] %vm789, %v778
        %796 = vst.msk [vmem:[#allocation3 + $0x30] sm:$0xff] %vm789, %v779
        %797 = vst.msk [vmem:[#allocation3 + $0x38] sm:$0xff] %vm789, %v780
        %798 = vst.msk [vmem:[#allocation3 + $0x40] sm:$0xff] %vm789, %v781
        %799 = vst.msk [vmem:[#allocation3 + $0x48] sm:$0xff] %vm789, %v782
        %800 = vst.msk [vmem:[#allocation3 + $0x50] sm:$0xff] %vm789, %v783
        %801 = vst.msk [vmem:[#allocation3 + $0x58] sm:$0xff] %vm789, %v784
        %802 = vst.msk [vmem:[#allocation3 + $0x60] sm:$0xff] %vm789, %v785
        %803 = vst.msk [vmem:[#allocation3 + $0x68] sm:$0xff] %vm789, %v786
        %804 = vst.msk [vmem:[#allocation3 + $0x70] sm:$0xff] %vm789, %v787
        %805 = vst.msk [vmem:[#allocation3 + $0x78] sm:$0xff] %vm789, %v788
        %v806 = vld [vmem:[#allocation4] sm:$0xff]
        %v807 = vld [vmem:[#allocation4 + $0x8] sm:$0xff]
        %v808 = vld [vmem:[#allocation4 + $0x10] sm:$0xff]
        %v809 = vld [vmem:[#allocation4 + $0x18] sm:$0xff]
        %v810 = vld [vmem:[#allocation4 + $0x20] sm:$0xff]
        %v811 = vld [vmem:[#allocation4 + $0x28] sm:$0xff]
        %v812 = vld [vmem:[#allocation4 + $0x30] sm:$0xff]
        %v813 = vld [vmem:[#allocation4 + $0x38] sm:$0xff]
        %v814 = vld [vmem:[#allocation4 + $0x40] sm:$0xff]
        %v815 = vld [vmem:[#allocation4 + $0x48] sm:$0xff]
        %v816 = vld [vmem:[#allocation4 + $0x50] sm:$0xff]
        %v817 = vld [vmem:[#allocation4 + $0x58] sm:$0xff]
        %v818 = vld [vmem:[#allocation4 + $0x60] sm:$0xff]
        %v819 = vld [vmem:[#allocation4 + $0x68] sm:$0xff]
        %v820 = vld [vmem:[#allocation4 + $0x70] sm:$0xff]
        %v821 = vld [vmem:[#allocation4 + $0x78] sm:$0xff]
        %823 = vset.pattern.permute.xlu0 0
        %824 = vperm.xlu0 %823, %v534
        %v825 = vpop.permute.xlu0 %824
        %828 = vset.pattern.permute.xlu0 0
        %829 = vperm.xlu0 %828, %v536
        %v830 = vpop.permute.xlu0 %829
        %833 = vset.pattern.permute.xlu0 0
        %834 = vperm.xlu0 %833, %v538
        %v835 = vpop.permute.xlu0 %834
        %838 = vset.pattern.permute.xlu0 0
        %839 = vperm.xlu0 %838, %v540
        %v840 = vpop.permute.xlu0 %839
        %843 = vset.pattern.permute.xlu0 0
        %844 = vperm.xlu0 %843, %v542
        %v845 = vpop.permute.xlu0 %844
        %848 = vset.pattern.permute.xlu0 0
        %849 = vperm.xlu0 %848, %v544
        %v850 = vpop.permute.xlu0 %849
        %853 = vset.pattern.permute.xlu0 0
        %854 = vperm.xlu0 %853, %v546
        %v855 = vpop.permute.xlu0 %854
        %858 = vset.pattern.permute.xlu0 0
        %859 = vperm.xlu0 %858, %v548
        %v860 = vpop.permute.xlu0 %859
        %863 = vset.pattern.permute.xlu0 0
        %864 = vperm.xlu0 %863, %v550
        %v865 = vpop.permute.xlu0 %864
        %868 = vset.pattern.permute.xlu0 0
        %869 = vperm.xlu0 %868, %v552
        %v870 = vpop.permute.xlu0 %869
        %873 = vset.pattern.permute.xlu0 0
        %874 = vperm.xlu0 %873, %v554
        %v875 = vpop.permute.xlu0 %874
        %878 = vset.pattern.permute.xlu0 0
        %879 = vperm.xlu0 %878, %v556
        %v880 = vpop.permute.xlu0 %879
        %883 = vset.pattern.permute.xlu0 0
        %884 = vperm.xlu0 %883, %v558
        %v885 = vpop.permute.xlu0 %884
        %888 = vset.pattern.permute.xlu0 0
        %889 = vperm.xlu0 %888, %v560
        %v890 = vpop.permute.xlu0 %889
        %893 = vset.pattern.permute.xlu0 0
        %894 = vperm.xlu0 %893, %v562
        %v895 = vpop.permute.xlu0 %894
        %898 = vset.pattern.permute.xlu0 0
        %899 = vperm.xlu0 %898, %v564
        %v900 = vpop.permute.xlu0 %899
        %v902 = vmul.f32 %v825, %v806
        %v903 = vmul.f32 %v830, %v807
        %v904 = vmul.f32 %v835, %v808
        %v905 = vmul.f32 %v840, %v809
        %v906 = vmul.f32 %v845, %v810
        %v907 = vmul.f32 %v850, %v811
        %v908 = vmul.f32 %v855, %v812
        %v909 = vmul.f32 %v860, %v813
        %v910 = vmul.f32 %v865, %v814
        %v911 = vmul.f32 %v870, %v815
        %v912 = vmul.f32 %v875, %v816
        %v913 = vmul.f32 %v880, %v817
        %v914 = vmul.f32 %v885, %v818
        %v915 = vmul.f32 %v890, %v819
        %v916 = vmul.f32 %v895, %v820
        %v917 = vmul.f32 %v900, %v821
        %v918 = vpack.c.bf16 %v664, %v662
        %v919 = vpack.c.bf16 %v668, %v666
        %v920 = vpack.c.bf16 %v672, %v670
        %v921 = vpack.c.bf16 %v676, %v674
        %v922 = vpack.c.bf16 %v680, %v678
        %v923 = vpack.c.bf16 %v684, %v682
        %v924 = vpack.c.bf16 %v688, %v686
        %v925 = vpack.c.bf16 %v692, %v690
        %v927 = vsel %vm452, %v918, 0
        %v930 = vsel %vm452, %v919, 0
        %v933 = vsel %vm452, %v920, 0
        %v936 = vsel %vm452, %v921, 0
        %v939 = vsel %vm452, %v922, 0
        %v942 = vsel %vm452, %v923, 0
        %v945 = vsel %vm452, %v924, 0
        %v948 = vsel %vm452, %v925, 0
        %950 = vmatprep.subr.bf16.mxu0 0
        %951 = vmatpush1.bf16.msra.mxu0 %v331
        %952 = vmatprep.subr.bf16.mxu0 0
        %953 = vmatpush1.bf16.msra.mxu0 %v332
        %954 = vmatprep.subr.bf16.mxu0 0
        %955 = vmatpush1.bf16.msra.mxu0 %v333
        %956 = vmatprep.subr.bf16.mxu0 0
        %957 = vmatpush1.bf16.msra.mxu0 %v334
        %958 = vmatprep.subr.bf16.mxu0 0
        %959 = vmatpush1.bf16.msra.mxu0 0
        %960 = vmatprep.subr.bf16.mxu0 0
        %961 = vmatpush1.bf16.msra.mxu0 0
        %962 = vmatprep.subr.bf16.mxu0 0
        %963 = vmatpush1.bf16.msra.mxu0 0
        %964 = vmatprep.subr.bf16.mxu0 0
        %965 = vmatpush1.bf16.msra.mxu0 0
        %966 = vmatprep.subr.bf16.mxu0 0
        %967 = vmatpush1.bf16.msra.mxu0 0
        %968 = vmatprep.subr.bf16.mxu0 0
        %969 = vmatpush1.bf16.msra.mxu0 0
        %970 = vmatprep.subr.bf16.mxu0 0
        %971 = vmatpush1.bf16.msra.mxu0 0
        %972 = vmatprep.subr.bf16.mxu0 0
        %973 = vmatpush1.bf16.msra.mxu0 0
        %974 = vmatprep.subr.bf16.mxu0 0
        %975 = vmatpush1.bf16.msra.mxu0 0
        %976 = vmatprep.subr.bf16.mxu0 0
        %977 = vmatpush1.bf16.msra.mxu0 0
        %978 = vmatprep.subr.bf16.mxu0 0
        %979 = vmatpush1.bf16.msra.mxu0 0
        %980 = vmatprep.subr.bf16.mxu0 0
        %981 = vmatpush1.bf16.msra.mxu0 0
        %982 = vmatprep.mubr.bf16.mxu0 0
        %983 = vmatmul.mubr.bf16.gmra.mrb[0].mxu0 %v927
        %v984 = vpop.f32.mrb[0].mxu0
        %v985 = vadd.f32 0.0, %v984
        %v986 = vpop.f32.mrb[0].mxu0
        %v987 = vpop.f32.mrb[0].mxu0
        %v988 = vadd.f32 0.0, %v987
        %v989 = vpop.f32.mrb[0].mxu0
        %990 = vmatprep.mubr.bf16.mxu0 0
        %991 = vmatmul.mubr.bf16.gmra.mrb[0].mxu0 %v930
        %v992 = vpop.f32.mrb[0].mxu0
        %v993 = vadd.f32 0.0, %v992
        %v994 = vpop.f32.mrb[0].mxu0
        %v995 = vpop.f32.mrb[0].mxu0
        %v996 = vadd.f32 0.0, %v995
        %v997 = vpop.f32.mrb[0].mxu0
        %998 = vmatprep.mubr.bf16.mxu0 0
        %999 = vmatmul.mubr.bf16.gmra.mrb[0].mxu0 %v933
        %v1000 = vpop.f32.mrb[0].mxu0
        %v1001 = vadd.f32 0.0, %v1000
        %v1002 = vpop.f32.mrb[0].mxu0
        %v1003 = vpop.f32.mrb[0].mxu0
        %v1004 = vadd.f32 0.0, %v1003
        %v1005 = vpop.f32.mrb[0].mxu0
        %1006 = vmatprep.mubr.bf16.mxu0 0
        %1007 = vmatmul.mubr.bf16.gmra.mrb[0].mxu0 %v936
        %v1008 = vpop.f32.mrb[0].mxu0
        %v1009 = vadd.f32 0.0, %v1008
        %v1010 = vpop.f32.mrb[0].mxu0
        %v1011 = vpop.f32.mrb[0].mxu0
        %v1012 = vadd.f32 0.0, %v1011
        %v1013 = vpop.f32.mrb[0].mxu0
        %1014 = vmatprep.mubr.bf16.mxu0 0
        %1015 = vmatmul.mubr.bf16.gmra.mrb[0].mxu0 %v939
        %v1016 = vpop.f32.mrb[0].mxu0
        %v1017 = vadd.f32 0.0, %v1016
        %v1018 = vpop.f32.mrb[0].mxu0
        %v1019 = vpop.f32.mrb[0].mxu0
        %v1020 = vadd.f32 0.0, %v1019
        %v1021 = vpop.f32.mrb[0].mxu0
        %1022 = vmatprep.mubr.bf16.mxu0 0
        %1023 = vmatmul.mubr.bf16.gmra.mrb[0].mxu0 %v942
        %v1024 = vpop.f32.mrb[0].mxu0
        %v1025 = vadd.f32 0.0, %v1024
        %v1026 = vpop.f32.mrb[0].mxu0
        %v1027 = vpop.f32.mrb[0].mxu0
        %v1028 = vadd.f32 0.0, %v1027
        %v1029 = vpop.f32.mrb[0].mxu0
        %1030 = vmatprep.mubr.bf16.mxu0 0
        %1031 = vmatmul.mubr.bf16.gmra.mrb[0].mxu0 %v945
        %v1032 = vpop.f32.mrb[0].mxu0
        %v1033 = vadd.f32 0.0, %v1032
        %v1034 = vpop.f32.mrb[0].mxu0
        %v1035 = vpop.f32.mrb[0].mxu0
        %v1036 = vadd.f32 0.0, %v1035
        %v1037 = vpop.f32.mrb[0].mxu0
        %1038 = vmatprep.mubr.bf16.mxu0 0
        %1039 = vmatmul.mubr.bf16.gmra.mrb[0].mxu0 %v948
        %v1040 = vpop.f32.mrb[0].mxu0
        %v1041 = vadd.f32 0.0, %v1040
        %v1042 = vpop.f32.mrb[0].mxu0
        %v1043 = vpop.f32.mrb[0].mxu0
        %v1044 = vadd.f32 0.0, %v1043
        %v1045 = vpop.f32.mrb[0].mxu0
        %1046 = vdwg.mxu0
        %v1047 = vadd.f32 %v902, %v985
        %v1048 = vadd.f32 %v903, %v988
        %v1049 = vadd.f32 %v904, %v993
        %v1050 = vadd.f32 %v905, %v996
        %v1051 = vadd.f32 %v906, %v1001
        %v1052 = vadd.f32 %v907, %v1004
        %v1053 = vadd.f32 %v908, %v1009
        %v1054 = vadd.f32 %v909, %v1012
        %v1055 = vadd.f32 %v910, %v1017
        %v1056 = vadd.f32 %v911, %v1020
        %v1057 = vadd.f32 %v912, %v1025
        %v1058 = vadd.f32 %v913, %v1028
        %v1059 = vadd.f32 %v914, %v1033
        %v1060 = vadd.f32 %v915, %v1036
        %v1061 = vadd.f32 %v916, %v1041
        %v1062 = vadd.f32 %v917, %v1044
        %1063 = vst [vmem:[#allocation4] sm:$0xff] %v1047
        %1064 = vst [vmem:[#allocation4 + $0x8] sm:$0xff] %v1048
        %1065 = vst [vmem:[#allocation4 + $0x10] sm:$0xff] %v1049
        %1066 = vst [vmem:[#allocation4 + $0x18] sm:$0xff] %v1050
        %1067 = vst [vmem:[#allocation4 + $0x20] sm:$0xff] %v1051
        %1068 = vst [vmem:[#allocation4 + $0x28] sm:$0xff] %v1052
        %1069 = vst [vmem:[#allocation4 + $0x30] sm:$0xff] %v1053
        %1070 = vst [vmem:[#allocation4 + $0x38] sm:$0xff] %v1054
        %1071 = vst [vmem:[#allocation4 + $0x40] sm:$0xff] %v1055
        %1072 = vst [vmem:[#allocation4 + $0x48] sm:$0xff] %v1056
        %1073 = vst [vmem:[#allocation4 + $0x50] sm:$0xff] %v1057
        %1074 = vst [vmem:[#allocation4 + $0x58] sm:$0xff] %v1058
        %1075 = vst [vmem:[#allocation4 + $0x60] sm:$0xff] %v1059
        %1076 = vst [vmem:[#allocation4 + $0x68] sm:$0xff] %v1060
        %1077 = vst [vmem:[#allocation4 + $0x70] sm:$0xff] %v1061
        %1078 = vst [vmem:[#allocation4 + $0x78] sm:$0xff] %v1062
        %1079 = vst.msk [vmem:[#allocation2] sm:$0xff] %vm789, %v501
        %1080 = vst.msk [vmem:[#allocation2 + $0x8] sm:$0xff] %vm789, %v502
        %1081 = vst.msk [vmem:[#allocation2 + $0x10] sm:$0xff] %vm789, %v503
        %1082 = vst.msk [vmem:[#allocation2 + $0x18] sm:$0xff] %vm789, %v504
        %1083 = vst.msk [vmem:[#allocation2 + $0x20] sm:$0xff] %vm789, %v505
        %1084 = vst.msk [vmem:[#allocation2 + $0x28] sm:$0xff] %vm789, %v506
        %1085 = vst.msk [vmem:[#allocation2 + $0x30] sm:$0xff] %vm789, %v507
        %1086 = vst.msk [vmem:[#allocation2 + $0x38] sm:$0xff] %vm789, %v508
        %1087 = vst.msk [vmem:[#allocation2 + $0x40] sm:$0xff] %vm789, %v509
        %1088 = vst.msk [vmem:[#allocation2 + $0x48] sm:$0xff] %vm789, %v510
        %1089 = vst.msk [vmem:[#allocation2 + $0x50] sm:$0xff] %vm789, %v511
        %1090 = vst.msk [vmem:[#allocation2 + $0x58] sm:$0xff] %vm789, %v512
        %1091 = vst.msk [vmem:[#allocation2 + $0x60] sm:$0xff] %vm789, %v513
        %1092 = vst.msk [vmem:[#allocation2 + $0x68] sm:$0xff] %vm789, %v514
        %1093 = vst.msk [vmem:[#allocation2 + $0x70] sm:$0xff] %vm789, %v515
        %1094 = vst.msk [vmem:[#allocation2 + $0x78] sm:$0xff] %vm789, %v516
        // Predicated region
        $region41: #{tpu_custom_call.1} parent=27 // pred_check
          %p1095 = pneg %p214
        $region42: #{tpu_custom_call.1} parent=27 // pred_check_branch
          %1097 = sbr.rel (%p1095) target = $region44
        $region43: #{tpu_custom_call.1} parent=27 // pred_region
          %v1098 = vld [vmem:[#allocation4] sm:$0xff]
          %v1099 = vld [vmem:[#allocation4 + $0x8] sm:$0xff]
          %v1100 = vld [vmem:[#allocation4 + $0x10] sm:$0xff]
          %v1101 = vld [vmem:[#allocation4 + $0x18] sm:$0xff]
          %v1102 = vld [vmem:[#allocation4 + $0x20] sm:$0xff]
          %v1103 = vld [vmem:[#allocation4 + $0x28] sm:$0xff]
          %v1104 = vld [vmem:[#allocation4 + $0x30] sm:$0xff]
          %v1105 = vld [vmem:[#allocation4 + $0x38] sm:$0xff]
          %v1106 = vld [vmem:[#allocation4 + $0x40] sm:$0xff]
          %v1107 = vld [vmem:[#allocation4 + $0x48] sm:$0xff]
          %v1108 = vld [vmem:[#allocation4 + $0x50] sm:$0xff]
          %v1109 = vld [vmem:[#allocation4 + $0x58] sm:$0xff]
          %v1110 = vld [vmem:[#allocation4 + $0x60] sm:$0xff]
          %v1111 = vld [vmem:[#allocation4 + $0x68] sm:$0xff]
          %v1112 = vld [vmem:[#allocation4 + $0x70] sm:$0xff]
          %v1113 = vld [vmem:[#allocation4 + $0x78] sm:$0xff]
          %v1114 = vld [vmem:[#allocation3] sm:$0xff]
          %v1115 = vld [vmem:[#allocation3 + $0x8] sm:$0xff]
          %v1116 = vld [vmem:[#allocation3 + $0x10] sm:$0xff]
          %v1117 = vld [vmem:[#allocation3 + $0x18] sm:$0xff]
          %v1118 = vld [vmem:[#allocation3 + $0x20] sm:$0xff]
          %v1119 = vld [vmem:[#allocation3 + $0x28] sm:$0xff]
          %v1120 = vld [vmem:[#allocation3 + $0x30] sm:$0xff]
          %v1121 = vld [vmem:[#allocation3 + $0x38] sm:$0xff]
          %v1122 = vld [vmem:[#allocation3 + $0x40] sm:$0xff]
          %v1123 = vld [vmem:[#allocation3 + $0x48] sm:$0xff]
          %v1124 = vld [vmem:[#allocation3 + $0x50] sm:$0xff]
          %v1125 = vld [vmem:[#allocation3 + $0x58] sm:$0xff]
          %v1126 = vld [vmem:[#allocation3 + $0x60] sm:$0xff]
          %v1127 = vld [vmem:[#allocation3 + $0x68] sm:$0xff]
          %v1128 = vld [vmem:[#allocation3 + $0x70] sm:$0xff]
          %v1129 = vld [vmem:[#allocation3 + $0x78] sm:$0xff]
          %1131 = vset.pattern.permute.xlu0 0
          %1132 = vperm.xlu0 %1131, %v1114
          %v1133 = vpop.permute.xlu0 %1132
          %1136 = vset.pattern.permute.xlu0 0
          %1137 = vperm.xlu0 %1136, %v1115
          %v1138 = vpop.permute.xlu0 %1137
          %1141 = vset.pattern.permute.xlu0 0
          %1142 = vperm.xlu0 %1141, %v1116
          %v1143 = vpop.permute.xlu0 %1142
          %1146 = vset.pattern.permute.xlu0 0
          %1147 = vperm.xlu0 %1146, %v1117
          %v1148 = vpop.permute.xlu0 %1147
          %1151 = vset.pattern.permute.xlu0 0
          %1152 = vperm.xlu0 %1151, %v1118
          %v1153 = vpop.permute.xlu0 %1152
          %1156 = vset.pattern.permute.xlu0 0
          %1157 = vperm.xlu0 %1156, %v1119
          %v1158 = vpop.permute.xlu0 %1157
          %1161 = vset.pattern.permute.xlu0 0
          %1162 = vperm.xlu0 %1161, %v1120
          %v1163 = vpop.permute.xlu0 %1162
          %1166 = vset.pattern.permute.xlu0 0
          %1167 = vperm.xlu0 %1166, %v1121
          %v1168 = vpop.permute.xlu0 %1167
          %1171 = vset.pattern.permute.xlu0 0
          %1172 = vperm.xlu0 %1171, %v1122
          %v1173 = vpop.permute.xlu0 %1172
          %1176 = vset.pattern.permute.xlu0 0
          %1177 = vperm.xlu0 %1176, %v1123
          %v1178 = vpop.permute.xlu0 %1177
          %1181 = vset.pattern.permute.xlu0 0
          %1182 = vperm.xlu0 %1181, %v1124
          %v1183 = vpop.permute.xlu0 %1182
          %1186 = vset.pattern.permute.xlu0 0
          %1187 = vperm.xlu0 %1186, %v1125
          %v1188 = vpop.permute.xlu0 %1187
          %1191 = vset.pattern.permute.xlu0 0
          %1192 = vperm.xlu0 %1191, %v1126
          %v1193 = vpop.permute.xlu0 %1192
          %1196 = vset.pattern.permute.xlu0 0
          %1197 = vperm.xlu0 %1196, %v1127
          %v1198 = vpop.permute.xlu0 %1197
          %1201 = vset.pattern.permute.xlu0 0
          %1202 = vperm.xlu0 %1201, %v1128
          %v1203 = vpop.permute.xlu0 %1202
          %1206 = vset.pattern.permute.xlu0 0
          %1207 = vperm.xlu0 %1206, %v1129
          %v1208 = vpop.permute.xlu0 %1207
          %v1210 = vrcp.pop %v1133
          %v1211 = vmul.f32 %v1098, %v1210
          %v1212 = vrcp.pop %v1138
          %v1213 = vmul.f32 %v1099, %v1212
          %v1214 = vrcp.pop %v1143
          %v1215 = vmul.f32 %v1100, %v1214
          %v1216 = vrcp.pop %v1148
          %v1217 = vmul.f32 %v1101, %v1216
          %v1218 = vrcp.pop %v1153
          %v1219 = vmul.f32 %v1102, %v1218
          %v1220 = vrcp.pop %v1158
          %v1221 = vmul.f32 %v1103, %v1220
          %v1222 = vrcp.pop %v1163
          %v1223 = vmul.f32 %v1104, %v1222
          %v1224 = vrcp.pop %v1168
          %v1225 = vmul.f32 %v1105, %v1224
          %v1226 = vrcp.pop %v1173
          %v1227 = vmul.f32 %v1106, %v1226
          %v1228 = vrcp.pop %v1178
          %v1229 = vmul.f32 %v1107, %v1228
          %v1230 = vrcp.pop %v1183
          %v1231 = vmul.f32 %v1108, %v1230
          %v1232 = vrcp.pop %v1188
          %v1233 = vmul.f32 %v1109, %v1232
          %v1234 = vrcp.pop %v1193
          %v1235 = vmul.f32 %v1110, %v1234
          %v1236 = vrcp.pop %v1198
          %v1237 = vmul.f32 %v1111, %v1236
          %v1238 = vrcp.pop %v1203
          %v1239 = vmul.f32 %v1112, %v1238
          %v1240 = vrcp.pop %v1208
          %v1241 = vmul.f32 %v1113, %v1240
          %1242 = vst [vmem:[%s209] sm:$0xff] %v1211
          %1243 = vst [vmem:[%s209 + $0x8] sm:$0xff] %v1213
          %1244 = vst [vmem:[%s209 + $0x10] sm:$0xff] %v1215
          %1245 = vst [vmem:[%s209 + $0x18] sm:$0xff] %v1217
          %1246 = vst [vmem:[%s209 + $0x20] sm:$0xff] %v1219
          %1247 = vst [vmem:[%s209 + $0x28] sm:$0xff] %v1221
          %1248 = vst [vmem:[%s209 + $0x30] sm:$0xff] %v1223
          %1249 = vst [vmem:[%s209 + $0x38] sm:$0xff] %v1225
          %1250 = vst [vmem:[%s209 + $0x40] sm:$0xff] %v1227
          %1251 = vst [vmem:[%s209 + $0x48] sm:$0xff] %v1229
          %1252 = vst [vmem:[%s209 + $0x50] sm:$0xff] %v1231
          %1253 = vst [vmem:[%s209 + $0x58] sm:$0xff] %v1233
          %1254 = vst [vmem:[%s209 + $0x60] sm:$0xff] %v1235
          %1255 = vst [vmem:[%s209 + $0x68] sm:$0xff] %v1237
          %1256 = vst [vmem:[%s209 + $0x70] sm:$0xff] %v1239
          %1257 = vst [vmem:[%s209 + $0x78] sm:$0xff] %v1241
        $region44: #{tpu_custom_call.1} parent=27 // pred_fallthru
          _
        %s1258 = sand.u32 %s103, 1
        %s1259 = scalar_lea.sflag [#allocation7], %s1258
        %s1260 = sand.u32 %s103, 1
        %s1261 = smul.addr %s1260, 128
        %s1262 = scalar_lea.vmem [#allocation10], %s1261
        // Predicated region
        $region45: #{tpu_custom_call.1} parent=27 // pred_check
          %p1263 = pneg %p113
        $region46: #{tpu_custom_call.1} parent=27 // pred_check_branch
          %1265 = sbr.rel (%p1263) target = $region48
        $region47: #{tpu_custom_call.1} parent=27 // pred_region
          %s1266 = smul.u32 16, %s26
          %s1268 = ssub.s32 2048, 2048
          %1269 = vsyncadd %s1259, %s1268
          %s1270 = smul.addr %s25, 16
          %s1271 = sadd.s32 %s1266, %s1270
          %s1272 = smul.addr %s1271, 128
          %s1273 = scalar_lea.hbm %s2, %s1272
          %s1274 = sshll.u32 %s1262, 4
          %s1275 = int_to_ptr.vmem [resolvable:$true] %s1274
          %1280 = dma.vmem_to_hbm [thread:$0]  %s1275, 2048, %s1273, %s1259, 128, 128, 8
        $region48: #{tpu_custom_call.1} parent=27 // pred_fallthru
          _
      $region28: #{tpu_custom_call.1} parent=5 // pred_fallthru
        _
      %p1281 = scmp.le.s32.totalorder 2, %s15
      // Predicated region
      $region49: #{tpu_custom_call.1} parent=5 // pred_check
        %p1282 = pneg %p1281
      $region50: #{tpu_custom_call.1} parent=5 // pred_check_branch
        %1284 = sbr.rel (%p1282) target = $region52
      $region51: #{tpu_custom_call.1} parent=5 // pred_region
        %s1285 = ssub.s32 %s15, 2
        // Predicated region
        $region53: #{tpu_custom_call.1} parent=51 // pred_check
          %p1286 = pneg %p119
        $region54: #{tpu_custom_call.1} parent=51 // pred_check_branch
          %1288 = sbr.rel (%p1286) target = $region56
        $region55: #{tpu_custom_call.1} parent=51 // pred_region
          %s1289 = sand.u32 %s104, 1
          %s1290 = scalar_lea.sflag [#allocation7], %s1289
          %s1291 = sand.u32 %s104, 1
          %s1292 = smul.addr %s1291, 128
          %s1293 = scalar_lea.vmem [#allocation10], %s1292
          %1294 = dma.done %s1290, 2048
        $region56: #{tpu_custom_call.1} parent=51 // pred_fallthru
          _
      $region52: #{tpu_custom_call.1} parent=5 // pred_fallthru
        _
    $region6: #{tpu_custom_call.1} parent=1 // loop_footer
      %s19 = sadd.s32 1, %s15
    $region7: #{tpu_custom_call.1} parent=1 // loop_footer_branch
      %14 = sbr.rel target = $region3
    $region8: #{tpu_custom_call.1} parent=1 // loop_exit
      _
    %1295 = vsyncpa [#allocation6], 1
    %s1296 = scalar_lea.sflag [#allocation6], 1
    %1297 = vsyncpa %s1296, 1
    %1298 = vsyncpa [#allocation9], 1
    %s1299 = scalar_lea.sflag [#allocation9], 1
    %1300 = vsyncpa %s1299, 1
    %1301 = vsyncpa [#allocation7], 1
    %s1302 = scalar_lea.sflag [#allocation7], 1
    %1303 = vsyncpa %s1302, 1

</llo_original>
